<compile_context>
chip_gen: v5e
topology: v5e:2x2
jax: 0.10.0
libtpu: 0.0.40
codegen_flags: <defaults>
</compile_context>

<pallas_src>
import jax
import jax.numpy as jnp
from jax.experimental import pallas as pl
from jax.experimental.pallas import tpu as pltpu

# Natural and lane-padded dimensions.
K_IN = 28 * 28      # 784 (streamed unpadded; full-extent last dim)
H1 = 128
H2 = 64
H2_PAD = 128
N_OUT = 10
N_PAD = 128


def studentnet_kernel(x_ref, w1_ref, w23_ref, b_ref, o_ref):
    """One batch tile: (tb, 784) -> relu(relu(relu(x@w1+b1)@w2+b2)@w3+b3)."""
    w1 = w1_ref[...]                       # (784, 128)
    w23 = w23_ref[...]                     # (128, 256) = [w2 | w3]
    bias = b_ref[...]                      # (3, 128) f32, rows = b1;b2;b3
    x = x_ref[...].astype(w1.dtype)        # cast in-kernel; no-op if same dtype

    # fc1 + ReLU (f32 accumulate, f32 epilogue)
    h = jnp.dot(x, w1, preferred_element_type=jnp.float32)
    h = jnp.maximum(h + bias[0:1, :], 0.0)

    # fc2 + ReLU (hidden padded 64 -> 128; padded lanes stay exactly 0)
    w2 = w23[:, :H1]
    h = jnp.dot(h.astype(w2.dtype), w2, preferred_element_type=jnp.float32)
    h = jnp.maximum(h + bias[1:2, :], 0.0)

    # fc3 + ReLU (logits padded 10 -> 128 for lane-dense stores)
    w3 = w23[:, H1:]
    h = jnp.dot(h.astype(w3.dtype), w3, preferred_element_type=jnp.float32)
    o_ref[...] = jnp.maximum(h + bias[2:3, :], 0.0).astype(o_ref.dtype)


def _round_up(n, m):
    return ((n + m - 1) // m) * m


def studentnet_forward(x_nchw, params, *, block_b=1024, out_dtype=jnp.float32):
    """x_nchw: (B, 1, 28, 28). Returns (B, 10) in out_dtype.

    params: natural-shape (w1 (784,128), b1 (1,128), w2 (128,64), b2 (1,64),
            w3 (64,10), b3 (1,10)) — weights stored as (in, out).
    The matmul input dtype follows x_nchw.dtype (pass bf16 x for the fast,
    half-HBM-traffic path); accumulation + bias/ReLU are always f32.
    """
    w1, b1, w2, b2, w3, b3 = params
    B = x_nchw.shape[0]

    # torch.flatten(x, 1): pure reshape — no pad, no cast, no extra HBM pass.
    x = x_nchw.reshape(B, -1)
    assert x.shape[1] == K_IN, x.shape
    mm_dtype = x.dtype

    # Constant operands (tiny): zero-pad hidden 64->128 and logits 10->128
    # (padded lanes stay exactly 0 through bias+ReLU), then pack.
    w1p = w1.astype(mm_dtype)                                        # (784,128)
    w2p = jnp.pad(w2, ((0, 0), (0, H2_PAD - H2)))                    # (128,128)
    w3p = jnp.pad(w3, ((0, H2_PAD - H2), (0, N_PAD - N_OUT)))        # (128,128)
    w23 = jnp.concatenate([w2p, w3p], axis=1).astype(mm_dtype)       # (128,256)
    b_pack = jnp.stack([
        b1.reshape(-1),
        jnp.pad(b2.reshape(-1), (0, H2_PAD - H2)),
        jnp.pad(b3.reshape(-1), (0, N_PAD - N_OUT)),
    ], axis=0).astype(jnp.float32)                                   # (3, 128)

    # Batch tiling. Sublane granularity: 8 rows (f32) / 16 rows (bf16 packing).
    sub = 16 if mm_dtype == jnp.bfloat16 else 8
    block_b = _round_up(max(int(block_b), sub), sub)
    b_min = _round_up(B, sub)
    # Cap the tile at ceil(B/2) so the "parallel" axis gives >= 2 grid steps
    # whenever the batch allows it (feeds both TensorCores on v7x).
    tb = min(block_b, _round_up(pl.cdiv(b_min, 2), sub))
    b_pad = _round_up(B, tb)
    if b_pad != B:
        x = jnp.pad(x, ((0, b_pad - B), (0, 0)))   # edge-only batch padding
    grid = (b_pad // tb,)

    x_item = jnp.dtype(mm_dtype).itemsize
    out_item = jnp.dtype(out_dtype).itemsize
    flops = 2 * b_pad * (K_IN * H1 + H1 * H2_PAD + H2_PAD * N_PAD)
    bytes_accessed = (
        b_pad * K_IN * x_item                                   # x (dominant)
        + (K_IN * H1 + H1 * 2 * H1) * x_item + 3 * H1 * 4       # weights+bias
        + b_pad * N_PAD * out_item)                             # out
    cost = pl.CostEstimate(flops=flops, transcendentals=0,
                           bytes_accessed=bytes_accessed)

    out = pl.pallas_call(
        studentnet_kernel,
        out_shape=jax.ShapeDtypeStruct((b_pad, N_PAD), out_dtype),
        grid=grid,
        in_specs=[
            pl.BlockSpec((tb, K_IN), lambda i: (i, 0)),     # x: streamed
            pl.BlockSpec((K_IN, H1), lambda i: (0, 0)),     # w1: VMEM-resident
            pl.BlockSpec((H1, 2 * H1), lambda i: (0, 0)),   # w2|w3 packed
            pl.BlockSpec((3, H1), lambda i: (0, 0)),        # b1;b2;b3 packed
        ],
        out_specs=pl.BlockSpec((tb, N_PAD), lambda i: (i, 0)),
        compiler_params=pltpu.CompilerParams(
            dimension_semantics=("parallel",)),
        cost_estimate=cost,
    )(x, w1p, w23, b_pack)

    # Strip batch padding and the 10 -> 128 lane padding of the logits.
    return out[:B, :N_OUT]


def init_params(key):
    """Deterministic init matching nn.Linear default U(-1/sqrt(fan_in), +)."""
    dims = [(K_IN, H1), (H1, H2), (H2, N_OUT)]
    params = []
    for fan_in, fan_out in dims:
        kw, kb, key = jax.random.split(key, 3)
        bound = 1.0 / jnp.sqrt(fan_in)
        w = jax.random.uniform(kw, (fan_in, fan_out), jnp.float32, -bound, bound)
        b = jax.random.uniform(kb, (1, fan_out), jnp.float32, -bound, bound)
        params += [w, b]
    return tuple(params)


def reference_forward(x_nchw, params):
    w1, b1, w2, b2, w3, b3 = params
    x = x_nchw.reshape(x_nchw.shape[0], -1).astype(jnp.float32)
    h = jnp.maximum(x @ w1 + b1, 0.0)
    h = jnp.maximum(h @ w2 + b2, 0.0)
    return jnp.maximum(h @ w3 + b3, 0.0)


if __name__ == "__main__":
    key = jax.random.PRNGKey(0)
    kx, kp = jax.random.split(key)
    params = init_params(kp)

    # Small batch (28x28 input implied by fc1 = Linear(784, 128)).
    x = jax.random.normal(kx, (2, 1, 28, 28), jnp.float32)
    ref = reference_forward(x, params)

    # f32 path: parity with the PyTorch forward.
    out = jax.block_until_ready(studentnet_forward(x, params))
    assert out.shape == (2, 10), out.shape
    assert jnp.allclose(out, ref, atol=1e-3, rtol=1e-3), "f32 mismatch vs reference"

    # bf16 activations streamed straight from HBM (cast upstream, not in the
    # wrapper); f32 accumulate + f32 epilogue, bf16 store.
    out_bf16 = jax.block_until_ready(
        studentnet_forward(x.astype(jnp.bfloat16), params, out_dtype=jnp.bfloat16))
    assert out_bf16.shape == (2, 10)
    assert jnp.allclose(out_bf16.astype(jnp.float32), ref,
                        atol=1e-1, rtol=1e-1), "bf16 path diverged"

    # Non-aligned batch exercising the multi-tile grid + edge batch padding.
    x_big = jax.random.normal(kx, (136, 1, 28, 28), jnp.float32)
    out_big = jax.block_until_ready(
        studentnet_forward(x_big, params, block_b=64))
    ref_big = reference_forward(x_big, params)
    assert out_big.shape == (136, 10)
    assert jnp.allclose(out_big, ref_big, atol=1e-3, rtol=1e-3), "tiled mismatch"

    print("KERNEL_OK")
</pallas_src>

<mosaic_0001>
module attributes {stable_mosaic.version = 11 : i64} {
  func.func @studentnet_kernel(%arg0: i32, %arg1: memref<8x784xf32, #tpu.memory_space<vmem>>, %arg2: memref<784x128xf32, #tpu.memory_space<vmem>>, %arg3: memref<128x256xf32, #tpu.memory_space<vmem>>, %arg4: memref<3x128xf32, #tpu.memory_space<vmem>>, %arg5: memref<8x128xf32, #tpu.memory_space<vmem>>) attributes {dimension_semantics = [#tpu.dimension_semantics<parallel>], iteration_bounds = array<i64: 1>, scalar_prefetch = 0 : i64, scratch_operands = 0 : i64, tpu.core_type = #tpu.core_type<tc>, window_params = [{transform_indices = @transform_0, window_bounds = array<i64: 8, 784>}, {pipeline_mode = #tpu.pipeline_mode<synchronous>, transform_indices = @transform_1, window_bounds = array<i64: 784, 128>}, {pipeline_mode = #tpu.pipeline_mode<synchronous>, transform_indices = @transform_2, window_bounds = array<i64: 128, 256>}, {pipeline_mode = #tpu.pipeline_mode<synchronous>, transform_indices = @transform_3, window_bounds = array<i64: 3, 128>}, {transform_indices = @transform_4, window_bounds = array<i64: 8, 128>}]} {
    %c0 = arith.constant 0 : index
    %c0_0 = arith.constant 0 : index
    %0 = vector.load %arg2[%c0, %c0_0] : memref<784x128xf32, #tpu.memory_space<vmem>>, vector<784x128xf32>
    %c0_1 = arith.constant 0 : index
    %c0_2 = arith.constant 0 : index
    %1 = vector.load %arg3[%c0_1, %c0_2] : memref<128x256xf32, #tpu.memory_space<vmem>>, vector<128x256xf32>
    %c0_3 = arith.constant 0 : index
    %c0_4 = arith.constant 0 : index
    %2 = vector.load %arg4[%c0_3, %c0_4] : memref<3x128xf32, #tpu.memory_space<vmem>>, vector<3x128xf32>
    %c0_5 = arith.constant 0 : index
    %c0_6 = arith.constant 0 : index
    %3 = vector.load %arg1[%c0_5, %c0_6] : memref<8x784xf32, #tpu.memory_space<vmem>>, vector<8x784xf32>
    %cst = arith.constant dense<0.000000e+00> : vector<8x128xf32>
    %4 = tpu.matmul %3, %0, %cst {dimension_numbers = #tpu.dot_dimension_numbers<[1], [0], [0], [1], [0, 0, 1, 1], [], []>} : vector<8x784xf32>, vector<784x128xf32>, vector<8x128xf32> -> vector<8x128xf32>
    %5 = vector.extract_strided_slice %2 {offsets = [0, 0], sizes = [1, 128], strides = [1, 1]} : vector<3x128xf32> to vector<1x128xf32>
    %6 = vector.broadcast %5 : vector<1x128xf32> to vector<8x128xf32>
    %7 = arith.addf %4, %6 : vector<8x128xf32>
    %cst_7 = arith.constant 0.000000e+00 : f32
    %8 = vector.broadcast %cst_7 : f32 to vector<8x128xf32>
    %9 = arith.maximumf %7, %8 : vector<8x128xf32>
    %10 = vector.extract_strided_slice %1 {offsets = [0, 0], sizes = [128, 128], strides = [1, 1]} : vector<128x256xf32> to vector<128x128xf32>
    %cst_8 = arith.constant dense<0.000000e+00> : vector<8x128xf32>
    %11 = tpu.matmul %9, %10, %cst_8 {dimension_numbers = #tpu.dot_dimension_numbers<[1], [0], [0], [1], [0, 0, 1, 1], [], []>} : vector<8x128xf32>, vector<128x128xf32>, vector<8x128xf32> -> vector<8x128xf32>
    %12 = vector.extract_strided_slice %2 {offsets = [1, 0], sizes = [1, 128], strides = [1, 1]} : vector<3x128xf32> to vector<1x128xf32>
    %13 = vector.broadcast %12 : vector<1x128xf32> to vector<8x128xf32>
    %14 = arith.addf %11, %13 : vector<8x128xf32>
    %cst_9 = arith.constant 0.000000e+00 : f32
    %15 = vector.broadcast %cst_9 : f32 to vector<8x128xf32>
    %16 = arith.maximumf %14, %15 : vector<8x128xf32>
    %17 = vector.extract_strided_slice %1 {offsets = [0, 128], sizes = [128, 128], strides = [1, 1]} : vector<128x256xf32> to vector<128x128xf32>
    %cst_10 = arith.constant dense<0.000000e+00> : vector<8x128xf32>
    %18 = tpu.matmul %16, %17, %cst_10 {dimension_numbers = #tpu.dot_dimension_numbers<[1], [0], [0], [1], [0, 0, 1, 1], [], []>} : vector<8x128xf32>, vector<128x128xf32>, vector<8x128xf32> -> vector<8x128xf32>
    %19 = vector.extract_strided_slice %2 {offsets = [2, 0], sizes = [1, 128], strides = [1, 1]} : vector<3x128xf32> to vector<1x128xf32>
    %20 = vector.broadcast %19 : vector<1x128xf32> to vector<8x128xf32>
    %21 = arith.addf %18, %20 : vector<8x128xf32>
    %cst_11 = arith.constant 0.000000e+00 : f32
    %22 = vector.broadcast %cst_11 : f32 to vector<8x128xf32>
    %23 = arith.maximumf %21, %22 : vector<8x128xf32>
    %c0_12 = arith.constant 0 : index
    %c0_13 = arith.constant 0 : index
    %24 = vector.load %arg5[%c0_12, %c0_13] : memref<8x128xf32, #tpu.memory_space<vmem>>, vector<8x128xf32>
    tpu.vector_store %arg5[%c0_12, %c0_13], %23 {strides = array<i32>} : memref<8x128xf32, #tpu.memory_space<vmem>>, vector<8x128xf32>,
    return
  }
  func.func @transform_0(%arg0: i32) -> (i32, i32) {
    %c0_i32 = arith.constant 0 : i32
    %c0_i32_0 = arith.constant 0 : i32
    return %arg0, %c0_i32 : i32, i32
  }
  func.func @transform_1(%arg0: i32) -> (i32, i32) {
    %c0_i32 = arith.constant 0 : i32
    %c0_i32_0 = arith.constant 0 : i32
    %c0_i32_1 = arith.constant 0 : i32
    return %c0_i32, %c0_i32_0 : i32, i32
  }
  func.func @transform_2(%arg0: i32) -> (i32, i32) {
    %c0_i32 = arith.constant 0 : i32
    %c0_i32_0 = arith.constant 0 : i32
    %c0_i32_1 = arith.constant 0 : i32
    return %c0_i32, %c0_i32_0 : i32, i32
  }
  func.func @transform_3(%arg0: i32) -> (i32, i32) {
    %c0_i32 = arith.constant 0 : i32
    %c0_i32_0 = arith.constant 0 : i32
    %c0_i32_1 = arith.constant 0 : i32
    return %c0_i32, %c0_i32_0 : i32, i32
  }
  func.func @transform_4(%arg0: i32) -> (i32, i32) {
    %c0_i32 = arith.constant 0 : i32
    %c0_i32_0 = arith.constant 0 : i32
    return %arg0, %c0_i32 : i32, i32
  }
}

</mosaic_0001>

<llo_original>
// kernel: tpu_custom_call.1
$region0: #{tpu_custom_call.1}
  #allocation0 [shape = 'u32[]', space=smem, size = 0x4, offset = 0x4, fixed_abs, tag = 'smem constant byte address 0x4 - core index']
  #allocation1 [shape = 'u32[72,128]{1,0:T(1,128)}', space=vmem, size = 0x9000, scoped, tag = 'internal scratch']
  %s0 = inlined_call_operand.hbm [shape: f32[8,784], index: 0, kind: input, shape index: {}]
  %s1 = inlined_call_operand.hbm [shape: f32[784,128], index: 1, kind: input, shape index: {}]
  %s2 = inlined_call_operand.hbm [shape: f32[128,256], index: 2, kind: input, shape index: {}]
  %s3 = inlined_call_operand.hbm [shape: f32[3,128], index: 3, kind: input, shape index: {}]
  %s4 = inlined_call_operand.hbm [shape: f32[8,128], index: 4, kind: output, shape index: {}]
  %s5 = sld [smem:[#allocation0]]
  $region42: #{tpu_custom_call.1} parent=0
    _
  %s7 = ssub.s32 1, %s5
  %s8 = scalar_select 0, %s7, %s5
  $region1: #{tpu_custom_call.1} parent=0
    #allocation2 [shape = 'u8[28672]{0}', space=vmem, size = 0x7000, scoped, tag = 'input window, operand 0, single buffered']
    #allocation3 [shape = 's32[1]{0}', space=sflag, size = 0x4, scoped, tag = 'scoped memory for tpu_custom_call.1']
    #allocation4 [shape = 's32[1]{0}', space=sflag, size = 0x4, scoped, tag = 'scoped memory for tpu_custom_call.1']
    #allocation5 [shape = 'u8[401408]{0}', space=vmem, size = 0x62000, scoped, tag = 'input window, operand 1, single buffered']
    #allocation6 [shape = 's32[1]{0}', space=sflag, size = 0x4, scoped, tag = 'scoped memory for tpu_custom_call.1']
    #allocation7 [shape = 'u8[131072]{0}', space=vmem, size = 0x20000, scoped, tag = 'input window, operand 2, single buffered']
    #allocation8 [shape = 'u8[2048]{0}', space=vmem, size = 0x800, scoped, tag = 'input window, operand 3, single buffered']
    #allocation9 [shape = 's32[1]{0}', space=sflag, size = 0x4, scoped, tag = 'scoped memory for tpu_custom_call.1']
    #allocation10 [shape = 'u8[4096]{0}', space=vmem, size = 0x1000, scoped, tag = 'output window, operand 0, single buffered']
    %9 = vsyncpa [#allocation3], 0
    %10 = vsyncpa [#allocation6], 0
    %11 = vsyncpa [#allocation9], 0
    %12 = vsyncpa [#allocation4], 0
    // Predicated region
    $region2: #{tpu_custom_call.1} parent=1 // pred_check
      _
    $region3: #{tpu_custom_call.1} parent=1 // pred_check_branch
      %14 = sbr.rel (0) target = $region5
    $region4: #{tpu_custom_call.1} parent=1 // pred_region
      %16 = vsyncadd [#allocation3], 0
      %s18 = sshll.u32 %s0, 4
      %s19 = int_to_ptr.hbm [resolvable:$true] %s18
      %s20 = sshll.u32 [#allocation2], 4
      %s21 = int_to_ptr.vmem [resolvable:$true] %s20
      %23 = dma.hbm_to_vmem [thread:$0]  %s19, 896, %s21, [#allocation3]
    $region5: #{tpu_custom_call.1} parent=1 // pred_fallthru
      _
    // Predicated region
    $region6: #{tpu_custom_call.1} parent=1 // pred_check
      _
    $region7: #{tpu_custom_call.1} parent=1 // pred_check_branch
      %25 = sbr.rel (0) target = $region9
    $region8: #{tpu_custom_call.1} parent=1 // pred_region
      %27 = vsyncadd [#allocation6], 0
      %s28 = sshll.u32 %s1, 4
      %s29 = int_to_ptr.hbm [resolvable:$true] %s28
      %s30 = sshll.u32 [#allocation5], 4
      %s31 = int_to_ptr.vmem [resolvable:$true] %s30
      %36 = dma.hbm_to_vmem [thread:$0]  %s29, 12544, %s31, [#allocation6], 128, 128, 8
    $region9: #{tpu_custom_call.1} parent=1 // pred_fallthru
      _
    // Predicated region
    $region10: #{tpu_custom_call.1} parent=1 // pred_check
      _
    $region11: #{tpu_custom_call.1} parent=1 // pred_check_branch
      %38 = sbr.rel (0) target = $region13
    $region12: #{tpu_custom_call.1} parent=1 // pred_region
      %40 = vsyncadd [#allocation6], 0
      %s41 = sshll.u32 %s2, 4
      %s42 = int_to_ptr.hbm [resolvable:$true] %s41
      %s43 = sshll.u32 [#allocation7], 4
      %s44 = int_to_ptr.vmem [resolvable:$true] %s43
      %49 = dma.hbm_to_vmem [thread:$0]  %s42, 4096, %s44, [#allocation6], 256, 256, 16
    $region13: #{tpu_custom_call.1} parent=1 // pred_fallthru
      _
    // Predicated region
    $region14: #{tpu_custom_call.1} parent=1 // pred_check
      _
    $region15: #{tpu_custom_call.1} parent=1 // pred_check_branch
      %51 = sbr.rel (0) target = $region17
    $region16: #{tpu_custom_call.1} parent=1 // pred_region
      %53 = vsyncadd [#allocation9], 0
      %s55 = sshll.u32 %s3, 4
      %s56 = int_to_ptr.hbm [resolvable:$true] %s55
      %s57 = sshll.u32 [#allocation8], 4
      %s58 = int_to_ptr.vmem [resolvable:$true] %s57
      %60 = dma.hbm_to_vmem [thread:$0]  %s56, 64, %s58, [#allocation9]
    $region17: #{tpu_custom_call.1} parent=1 // pred_fallthru
      _
    // Predicated region
    $region18: #{tpu_custom_call.1} parent=1 // pred_check
      _
    $region19: #{tpu_custom_call.1} parent=1 // pred_check_branch
      %62 = sbr.rel (0) target = $region21
    $region20: #{tpu_custom_call.1} parent=1 // pred_region
      %64 = dma.done [#allocation3], 896
    $region21: #{tpu_custom_call.1} parent=1 // pred_fallthru
      _
    // Predicated region
    $region22: #{tpu_custom_call.1} parent=1 // pred_check
      _
    $region23: #{tpu_custom_call.1} parent=1 // pred_check_branch
      %66 = sbr.rel (0) target = $region25
    $region24: #{tpu_custom_call.1} parent=1 // pred_region
      %68 = dma.done [#allocation6], 12544
    $region25: #{tpu_custom_call.1} parent=1 // pred_fallthru
      _
    // Predicated region
    $region26: #{tpu_custom_call.1} parent=1 // pred_check
      _
    $region27: #{tpu_custom_call.1} parent=1 // pred_check_branch
      %70 = sbr.rel (0) target = $region29
    $region28: #{tpu_custom_call.1} parent=1 // pred_region
      %72 = dma.done [#allocation6], 4096
    $region29: #{tpu_custom_call.1} parent=1 // pred_fallthru
      _
    // Predicated region
    $region30: #{tpu_custom_call.1} parent=1 // pred_check
      _
    $region31: #{tpu_custom_call.1} parent=1 // pred_check_branch
      %74 = sbr.rel (0) target = $region33
    $region32: #{tpu_custom_call.1} parent=1 // pred_region
      %76 = dma.done [#allocation9], 64
    $region33: #{tpu_custom_call.1} parent=1 // pred_fallthru
      _
    %v77 = vld [vmem:[#allocation5] sm:$0xff]
    %v78 = vld [vmem:[#allocation5 + $0x8] sm:$0xff]
    %v79 = vld [vmem:[#allocation5 + $0x10] sm:$0xff]
    %v80 = vld [vmem:[#allocation5 + $0x18] sm:$0xff]
    %v81 = vld [vmem:[#allocation5 + $0x20] sm:$0xff]
    %v82 = vld [vmem:[#allocation5 + $0x28] sm:$0xff]
    %v83 = vld [vmem:[#allocation5 + $0x30] sm:$0xff]
    %v84 = vld [vmem:[#allocation5 + $0x38] sm:$0xff]
    %v85 = vld [vmem:[#allocation5 + $0x40] sm:$0xff]
    %v86 = vld [vmem:[#allocation5 + $0x48] sm:$0xff]
    %v87 = vld [vmem:[#allocation5 + $0x50] sm:$0xff]
    %v88 = vld [vmem:[#allocation5 + $0x58] sm:$0xff]
    %v89 = vld [vmem:[#allocation5 + $0x60] sm:$0xff]
    %v90 = vld [vmem:[#allocation5 + $0x68] sm:$0xff]
    %v91 = vld [vmem:[#allocation5 + $0x70] sm:$0xff]
    %v92 = vld [vmem:[#allocation5 + $0x78] sm:$0xff]
    %v93 = vld [vmem:[#allocation5 + $0x80] sm:$0xff]
    %v94 = vld [vmem:[#allocation5 + $0x88] sm:$0xff]
    %v95 = vld [vmem:[#allocation5 + $0x90] sm:$0xff]
    %v96 = vld [vmem:[#allocation5 + $0x98] sm:$0xff]
    %v97 = vld [vmem:[#allocation5 + $0xa0] sm:$0xff]
    %v98 = vld [vmem:[#allocation5 + $0xa8] sm:$0xff]
    %v99 = vld [vmem:[#allocation5 + $0xb0] sm:$0xff]
    %v100 = vld [vmem:[#allocation5 + $0xb8] sm:$0xff]
    %v101 = vld [vmem:[#allocation5 + $0xc0] sm:$0xff]
    %v102 = vld [vmem:[#allocation5 + $0xc8] sm:$0xff]
    %v103 = vld [vmem:[#allocation5 + $0xd0] sm:$0xff]
    %v104 = vld [vmem:[#allocation5 + $0xd8] sm:$0xff]
    %v105 = vld [vmem:[#allocation5 + $0xe0] sm:$0xff]
    %v106 = vld [vmem:[#allocation5 + $0xe8] sm:$0xff]
    %v107 = vld [vmem:[#allocation5 + $0xf0] sm:$0xff]
    %v108 = vld [vmem:[#allocation5 + $0xf8] sm:$0xff]
    %v109 = vld [vmem:[#allocation5 + $0x100] sm:$0xff]
    %v110 = vld [vmem:[#allocation5 + $0x108] sm:$0xff]
    %v111 = vld [vmem:[#allocation5 + $0x110] sm:$0xff]
    %v112 = vld [vmem:[#allocation5 + $0x118] sm:$0xff]
    %v113 = vld [vmem:[#allocation5 + $0x120] sm:$0xff]
    %v114 = vld [vmem:[#allocation5 + $0x128] sm:$0xff]
    %v115 = vld [vmem:[#allocation5 + $0x130] sm:$0xff]
    %v116 = vld [vmem:[#allocation5 + $0x138] sm:$0xff]
    %v117 = vld [vmem:[#allocation5 + $0x140] sm:$0xff]
    %v118 = vld [vmem:[#allocation5 + $0x148] sm:$0xff]
    %v119 = vld [vmem:[#allocation5 + $0x150] sm:$0xff]
    %v120 = vld [vmem:[#allocation5 + $0x158] sm:$0xff]
    %v121 = vld [vmem:[#allocation5 + $0x160] sm:$0xff]
    %v122 = vld [vmem:[#allocation5 + $0x168] sm:$0xff]
    %v123 = vld [vmem:[#allocation5 + $0x170] sm:$0xff]
    %v124 = vld [vmem:[#allocation5 + $0x178] sm:$0xff]
    %v125 = vld [vmem:[#allocation5 + $0x180] sm:$0xff]
    %v126 = vld [vmem:[#allocation5 + $0x188] sm:$0xff]
    %v127 = vld [vmem:[#allocation5 + $0x190] sm:$0xff]
    %v128 = vld [vmem:[#allocation5 + $0x198] sm:$0xff]
    %v129 = vld [vmem:[#allocation5 + $0x1a0] sm:$0xff]
    %v130 = vld [vmem:[#allocation5 + $0x1a8] sm:$0xff]
    %v131 = vld [vmem:[#allocation5 + $0x1b0] sm:$0xff]
    %v132 = vld [vmem:[#allocation5 + $0x1b8] sm:$0xff]
    %v133 = vld [vmem:[#allocation5 + $0x1c0] sm:$0xff]
    %v134 = vld [vmem:[#allocation5 + $0x1c8] sm:$0xff]
    %v135 = vld [vmem:[#allocation5 + $0x1d0] sm:$0xff]
    %v136 = vld [vmem:[#allocation5 + $0x1d8] sm:$0xff]
    %v137 = vld [vmem:[#allocation5 + $0x1e0] sm:$0xff]
    %v138 = vld [vmem:[#allocation5 + $0x1e8] sm:$0xff]
    %v139 = vld [vmem:[#allocation5 + $0x1f0] sm:$0xff]
    %v140 = vld [vmem:[#allocation5 + $0x1f8] sm:$0xff]
    %v141 = vld [vmem:[#allocation5 + $0x200] sm:$0xff]
    %v142 = vld [vmem:[#allocation5 + $0x208] sm:$0xff]
    %v143 = vld [vmem:[#allocation5 + $0x210] sm:$0xff]
    %v144 = vld [vmem:[#allocation5 + $0x218] sm:$0xff]
    %v145 = vld [vmem:[#allocation5 + $0x220] sm:$0xff]
    %v146 = vld [vmem:[#allocation5 + $0x228] sm:$0xff]
    %v147 = vld [vmem:[#allocation5 + $0x230] sm:$0xff]
    %v148 = vld [vmem:[#allocation5 + $0x238] sm:$0xff]
    %v149 = vld [vmem:[#allocation5 + $0x240] sm:$0xff]
    %v150 = vld [vmem:[#allocation5 + $0x248] sm:$0xff]
    %v151 = vld [vmem:[#allocation5 + $0x250] sm:$0xff]
    %v152 = vld [vmem:[#allocation5 + $0x258] sm:$0xff]
    %v153 = vld [vmem:[#allocation5 + $0x260] sm:$0xff]
    %v154 = vld [vmem:[#allocation5 + $0x268] sm:$0xff]
    %v155 = vld [vmem:[#allocation5 + $0x270] sm:$0xff]
    %v156 = vld [vmem:[#allocation5 + $0x278] sm:$0xff]
    %v157 = vld [vmem:[#allocation5 + $0x280] sm:$0xff]
    %v158 = vld [vmem:[#allocation5 + $0x288] sm:$0xff]
    %v159 = vld [vmem:[#allocation5 + $0x290] sm:$0xff]
    %v160 = vld [vmem:[#allocation5 + $0x298] sm:$0xff]
    %v161 = vld [vmem:[#allocation5 + $0x2a0] sm:$0xff]
    %v162 = vld [vmem:[#allocation5 + $0x2a8] sm:$0xff]
    %v163 = vld [vmem:[#allocation5 + $0x2b0] sm:$0xff]
    %v164 = vld [vmem:[#allocation5 + $0x2b8] sm:$0xff]
    %v165 = vld [vmem:[#allocation5 + $0x2c0] sm:$0xff]
    %v166 = vld [vmem:[#allocation5 + $0x2c8] sm:$0xff]
    %v167 = vld [vmem:[#allocation5 + $0x2d0] sm:$0xff]
    %v168 = vld [vmem:[#allocation5 + $0x2d8] sm:$0xff]
    %v169 = vld [vmem:[#allocation5 + $0x2e0] sm:$0xff]
    %v170 = vld [vmem:[#allocation5 + $0x2e8] sm:$0xff]
    %v171 = vld [vmem:[#allocation5 + $0x2f0] sm:$0xff]
    %v172 = vld [vmem:[#allocation5 + $0x2f8] sm:$0xff]
    %v173 = vld [vmem:[#allocation5 + $0x300] sm:$0xff]
    %v174 = vld [vmem:[#allocation5 + $0x308] sm:$0xff]
    %v175 = vld [vmem:[#allocation7] sm:$0xff]
    %v176 = vld [vmem:[#allocation7 + $0x8] sm:$0xff]
    %v177 = vld [vmem:[#allocation7 + $0x10] sm:$0xff]
    %v178 = vld [vmem:[#allocation7 + $0x18] sm:$0xff]
    %v179 = vld [vmem:[#allocation7 + $0x20] sm:$0xff]
    %v180 = vld [vmem:[#allocation7 + $0x28] sm:$0xff]
    %v181 = vld [vmem:[#allocation7 + $0x30] sm:$0xff]
    %v182 = vld [vmem:[#allocation7 + $0x38] sm:$0xff]
    %v183 = vld [vmem:[#allocation7 + $0x40] sm:$0xff]
    %v184 = vld [vmem:[#allocation7 + $0x48] sm:$0xff]
    %v185 = vld [vmem:[#allocation7 + $0x50] sm:$0xff]
    %v186 = vld [vmem:[#allocation7 + $0x58] sm:$0xff]
    %v187 = vld [vmem:[#allocation7 + $0x60] sm:$0xff]
    %v188 = vld [vmem:[#allocation7 + $0x68] sm:$0xff]
    %v189 = vld [vmem:[#allocation7 + $0x70] sm:$0xff]
    %v190 = vld [vmem:[#allocation7 + $0x78] sm:$0xff]
    %v191 = vld [vmem:[#allocation7 + $0x80] sm:$0xff]
    %v192 = vld [vmem:[#allocation7 + $0x88] sm:$0xff]
    %v193 = vld [vmem:[#allocation7 + $0x90] sm:$0xff]
    %v194 = vld [vmem:[#allocation7 + $0x98] sm:$0xff]
    %v195 = vld [vmem:[#allocation7 + $0xa0] sm:$0xff]
    %v196 = vld [vmem:[#allocation7 + $0xa8] sm:$0xff]
    %v197 = vld [vmem:[#allocation7 + $0xb0] sm:$0xff]
    %v198 = vld [vmem:[#allocation7 + $0xb8] sm:$0xff]
    %v199 = vld [vmem:[#allocation7 + $0xc0] sm:$0xff]
    %v200 = vld [vmem:[#allocation7 + $0xc8] sm:$0xff]
    %v201 = vld [vmem:[#allocation7 + $0xd0] sm:$0xff]
    %v202 = vld [vmem:[#allocation7 + $0xd8] sm:$0xff]
    %v203 = vld [vmem:[#allocation7 + $0xe0] sm:$0xff]
    %v204 = vld [vmem:[#allocation7 + $0xe8] sm:$0xff]
    %v205 = vld [vmem:[#allocation7 + $0xf0] sm:$0xff]
    %v206 = vld [vmem:[#allocation7 + $0xf8] sm:$0xff]
    %v207 = vld [vmem:[#allocation8] sm:$0x7]
    %v208 = vld [vmem:[#allocation2] sm:$0xff]
    %v209 = vld [vmem:[#allocation2 + $0x8] sm:$0xff]
    %v210 = vld [vmem:[#allocation2 + $0x10] sm:$0xff]
    %v211 = vld [vmem:[#allocation2 + $0x18] sm:$0xff]
    %v212 = vld [vmem:[#allocation2 + $0x20] sm:$0xff]
    %v213 = vld [vmem:[#allocation2 + $0x28] sm:$0xff]
    %v214 = vld [vmem:[#allocation2 + $0x30] sm:$0xff]
    %v215 = vperm.slane %v207, 0
    %vm216 = vcmask 130048
    %v218 = vsel %vm216, %v214, 0
    %220 = vmatpush.msra.mxu0 %v92
    %221 = vmatpush.msra.mxu0 %v91
    %222 = vmatpush.msra.mxu0 %v90
    %223 = vmatpush.msra.mxu0 %v89
    %224 = vmatpush.msra.mxu0 %v88
    %225 = vmatpush.msra.mxu0 %v87
    %226 = vmatpush.msra.mxu0 %v86
    %227 = vmatpush.msra.mxu0 %v85
    %228 = vmatpush.msra.mxu0 %v84
    %229 = vmatpush.msra.mxu0 %v83
    %230 = vmatpush.msra.mxu0 %v82
    %231 = vmatpush.msra.mxu0 %v81
    %232 = vmatpush.msra.mxu0 %v80
    %233 = vmatpush.msra.mxu0 %v79
    %234 = vmatpush.msra.mxu0 %v78
    %235 = vmatpush.msra.mxu0 %v77
    %236 = vmatmul.f32.gmra.mxu0 %v208
    %v237 = vpop.f32.mrf.mxu0
    %v238 = vadd.f32 %v215, %v237
    %239 = vdwg.mxu0
    %240 = vmatpush.msra.mxu0 %v108
    %241 = vmatpush.msra.mxu0 %v107
    %242 = vmatpush.msra.mxu0 %v106
    %243 = vmatpush.msra.mxu0 %v105
    %244 = vmatpush.msra.mxu0 %v104
    %245 = vmatpush.msra.mxu0 %v103
    %246 = vmatpush.msra.mxu0 %v102
    %247 = vmatpush.msra.mxu0 %v101
    %248 = vmatpush.msra.mxu0 %v100
    %249 = vmatpush.msra.mxu0 %v99
    %250 = vmatpush.msra.mxu0 %v98
    %251 = vmatpush.msra.mxu0 %v97
    %252 = vmatpush.msra.mxu0 %v96
    %253 = vmatpush.msra.mxu0 %v95
    %254 = vmatpush.msra.mxu0 %v94
    %255 = vmatpush.msra.mxu0 %v93
    %256 = vmatmul.f32.gmra.mxu0 %v209
    %v257 = vpop.f32.mrf.mxu0
    %v258 = vadd.f32 %v238, %v257
    %259 = vdwg.mxu0
    %260 = vmatpush.msra.mxu0 %v124
    %261 = vmatpush.msra.mxu0 %v123
    %262 = vmatpush.msra.mxu0 %v122
    %263 = vmatpush.msra.mxu0 %v121
    %264 = vmatpush.msra.mxu0 %v120
    %265 = vmatpush.msra.mxu0 %v119
    %266 = vmatpush.msra.mxu0 %v118
    %267 = vmatpush.msra.mxu0 %v117
    %268 = vmatpush.msra.mxu0 %v116
    %269 = vmatpush.msra.mxu0 %v115
    %270 = vmatpush.msra.mxu0 %v114
    %271 = vmatpush.msra.mxu0 %v113
    %272 = vmatpush.msra.mxu0 %v112
    %273 = vmatpush.msra.mxu0 %v111
    %274 = vmatpush.msra.mxu0 %v110
    %275 = vmatpush.msra.mxu0 %v109
    %276 = vmatmul.f32.gmra.mxu0 %v210
    %v277 = vpop.f32.mrf.mxu0
    %v278 = vadd.f32 %v258, %v277
    %279 = vdwg.mxu0
    %280 = vmatpush.msra.mxu0 %v140
    %281 = vmatpush.msra.mxu0 %v139
    %282 = vmatpush.msra.mxu0 %v138
    %283 = vmatpush.msra.mxu0 %v137
    %284 = vmatpush.msra.mxu0 %v136
    %285 = vmatpush.msra.mxu0 %v135
    %286 = vmatpush.msra.mxu0 %v134
    %287 = vmatpush.msra.mxu0 %v133
    %288 = vmatpush.msra.mxu0 %v132
    %289 = vmatpush.msra.mxu0 %v131
    %290 = vmatpush.msra.mxu0 %v130
    %291 = vmatpush.msra.mxu0 %v129
    %292 = vmatpush.msra.mxu0 %v128
    %293 = vmatpush.msra.mxu0 %v127
    %294 = vmatpush.msra.mxu0 %v126
    %295 = vmatpush.msra.mxu0 %v125
    %296 = vmatmul.f32.gmra.mxu0 %v211
    %v297 = vpop.f32.mrf.mxu0
    %v298 = vadd.f32 %v278, %v297
    %299 = vdwg.mxu0
    %300 = vmatpush.msra.mxu0 %v156
    %301 = vmatpush.msra.mxu0 %v155
    %302 = vmatpush.msra.mxu0 %v154
    %303 = vmatpush.msra.mxu0 %v153
    %304 = vmatpush.msra.mxu0 %v152
    %305 = vmatpush.msra.mxu0 %v151
    %306 = vmatpush.msra.mxu0 %v150
    %307 = vmatpush.msra.mxu0 %v149
    %308 = vmatpush.msra.mxu0 %v148
    %309 = vmatpush.msra.mxu0 %v147
    %310 = vmatpush.msra.mxu0 %v146
    %311 = vmatpush.msra.mxu0 %v145
    %312 = vmatpush.msra.mxu0 %v144
    %313 = vmatpush.msra.mxu0 %v143
    %314 = vmatpush.msra.mxu0 %v142
    %315 = vmatpush.msra.mxu0 %v141
    %316 = vmatmul.f32.gmra.mxu0 %v212
    %v317 = vpop.f32.mrf.mxu0
    %v318 = vadd.f32 %v298, %v317
    %319 = vdwg.mxu0
    %320 = vmatpush.msra.mxu0 %v172
    %321 = vmatpush.msra.mxu0 %v171
    %322 = vmatpush.msra.mxu0 %v170
    %323 = vmatpush.msra.mxu0 %v169
    %324 = vmatpush.msra.mxu0 %v168
    %325 = vmatpush.msra.mxu0 %v167
    %326 = vmatpush.msra.mxu0 %v166
    %327 = vmatpush.msra.mxu0 %v165
    %328 = vmatpush.msra.mxu0 %v164
    %329 = vmatpush.msra.mxu0 %v163
    %330 = vmatpush.msra.mxu0 %v162
    %331 = vmatpush.msra.mxu0 %v161
    %332 = vmatpush.msra.mxu0 %v160
    %333 = vmatpush.msra.mxu0 %v159
    %334 = vmatpush.msra.mxu0 %v158
    %335 = vmatpush.msra.mxu0 %v157
    %336 = vmatmul.f32.gmra.mxu0 %v213
    %v337 = vpop.f32.mrf.mxu0
    %v338 = vadd.f32 %v318, %v337
    %339 = vdwg.mxu0
    %340 = vmatpush.msra.mxu0 0.0
    %341 = vmatpush.msra.mxu0 0.0
    %342 = vmatpush.msra.mxu0 0.0
    %343 = vmatpush.msra.mxu0 0.0
    %344 = vmatpush.msra.mxu0 0.0
    %345 = vmatpush.msra.mxu0 0.0
    %346 = vmatpush.msra.mxu0 0.0
    %347 = vmatpush.msra.mxu0 0.0
    %348 = vmatpush.msra.mxu0 0.0
    %349 = vmatpush.msra.mxu0 0.0
    %350 = vmatpush.msra.mxu0 0.0
    %351 = vmatpush.msra.mxu0 0.0
    %352 = vmatpush.msra.mxu0 0.0
    %353 = vmatpush.msra.mxu0 0.0
    %354 = vmatpush.msra.mxu0 %v174
    %355 = vmatpush.msra.mxu0 %v173
    %356 = vmatmul.f32.gmra.mxu0 %v218
    %v357 = vpop.f32.mrf.mxu0
    %v358 = vadd.f32 %v338, %v357
    %359 = vdwg.mxu0
    %v360 = vmax.f32 %v358, 0.0
    %v361 = vperm.slane %v207, 1
    %362 = vmatpush.msra.mxu0 %v205
    %363 = vmatpush.msra.mxu0 %v203
    %364 = vmatpush.msra.mxu0 %v201
    %365 = vmatpush.msra.mxu0 %v199
    %366 = vmatpush.msra.mxu0 %v197
    %367 = vmatpush.msra.mxu0 %v195
    %368 = vmatpush.msra.mxu0 %v193
    %369 = vmatpush.msra.mxu0 %v191
    %370 = vmatpush.msra.mxu0 %v189
    %371 = vmatpush.msra.mxu0 %v187
    %372 = vmatpush.msra.mxu0 %v185
    %373 = vmatpush.msra.mxu0 %v183
    %374 = vmatpush.msra.mxu0 %v181
    %375 = vmatpush.msra.mxu0 %v179
    %376 = vmatpush.msra.mxu0 %v177
    %377 = vmatpush.msra.mxu0 %v175
    %378 = vmatmul.f32.gmra.mxu0 %v360
    %v379 = vpop.f32.mrf.mxu0
    %v380 = vadd.f32 %v361, %v379
    %381 = vdwg.mxu0
    %v382 = vmax.f32 %v380, 0.0
    %v383 = vperm.slane %v207, 2
    %384 = vmatpush.msra.mxu0 %v206
    %385 = vmatpush.msra.mxu0 %v204
    %386 = vmatpush.msra.mxu0 %v202
    %387 = vmatpush.msra.mxu0 %v200
    %388 = vmatpush.msra.mxu0 %v198
    %389 = vmatpush.msra.mxu0 %v196
    %390 = vmatpush.msra.mxu0 %v194
    %391 = vmatpush.msra.mxu0 %v192
    %392 = vmatpush.msra.mxu0 %v190
    %393 = vmatpush.msra.mxu0 %v188
    %394 = vmatpush.msra.mxu0 %v186
    %395 = vmatpush.msra.mxu0 %v184
    %396 = vmatpush.msra.mxu0 %v182
    %397 = vmatpush.msra.mxu0 %v180
    %398 = vmatpush.msra.mxu0 %v178
    %399 = vmatpush.msra.mxu0 %v176
    %400 = vmatmul.f32.gmra.mxu0 %v382
    %v401 = vpop.f32.mrf.mxu0
    %v402 = vadd.f32 %v383, %v401
    %403 = vdwg.mxu0
    %v404 = vmax.f32 %v402, 0.0
    %405 = vst [vmem:[#allocation10] sm:$0xff] %v404
    // Predicated region
    $region34: #{tpu_custom_call.1} parent=1 // pred_check
      _
    $region35: #{tpu_custom_call.1} parent=1 // pred_check_branch
      %407 = sbr.rel (0) target = $region37
    $region36: #{tpu_custom_call.1} parent=1 // pred_region
      %409 = vsyncadd [#allocation4], 0
      %s411 = sshll.u32 [#allocation10], 4
      %s412 = int_to_ptr.vmem [resolvable:$true] %s411
      %s413 = sshll.u32 %s4, 4
      %s414 = int_to_ptr.hbm [resolvable:$true] %s413
      %416 = dma.vmem_to_hbm [thread:$0]  %s412, 128, %s414, [#allocation4]
    $region37: #{tpu_custom_call.1} parent=1 // pred_fallthru
      _
    // Predicated region
    $region38: #{tpu_custom_call.1} parent=1 // pred_check
      _
    $region39: #{tpu_custom_call.1} parent=1 // pred_check_branch
      %418 = sbr.rel (0) target = $region41
    $region40: #{tpu_custom_call.1} parent=1 // pred_region
      %420 = dma.done [#allocation4], 128
    $region41: #{tpu_custom_call.1} parent=1 // pred_fallthru
      _
    %421 = vsyncpa [#allocation3], 1
    %422 = vsyncpa [#allocation6], 1
    %423 = vsyncpa [#allocation9], 1
    %424 = vsyncpa [#allocation4], 1

</llo_original>
